<compile_context>
chip_gen: v6e
topology: v6e:2x2x1
jax: 0.10.0
libtpu: 0.0.40
codegen_flags: <defaults>
</compile_context>

<pallas_src>
import functools

import jax
import jax.numpy as jnp
import numpy as np
from jax.experimental import pallas as pl
from jax.experimental.pallas import tpu as pltpu


# ----------------------------------------------------------------------------
# Fused Pallas kernel: conv stack + VAE head + reparameterization
# ----------------------------------------------------------------------------
def fused_text_encoder_kernel(x_ref, w_ref, b_ref, eps_ref, out_ref,
                              *, num_layers, latent_dim):
    """Whole TextEncoder forward in one kernel; everything stays on-chip.

    x_ref   : (TB, D)           NCL-flattened + zero-padded input, f32
    w_ref   : (nl+1, D, D)      bf16: banded conv-as-matmul weights for layers
                                0..nl-1 and the padded [fc_mu|fc_logvar] head
                                at index nl (rows pre-permuted at pack time)
    b_ref   : (nl+1, D)         f32: tiled conv biases; row nl = [mu_b|lv_b|0]
    eps_ref : (TB, Z)           uniform [0,1) noise (torch.rand_like semantics)
    out_ref : (TB, D)           lane-dense slab: [z | mu | logvar | 0...]
    """
    Z = latent_dim
    h = x_ref[...]                                             # (TB, D) f32
    for i in range(num_layers):                                # static unroll
        # identical full-tile matmul per layer: bf16 MXU inputs, f32 acc
        h = jnp.maximum(
            jnp.dot(h.astype(jnp.bfloat16), w_ref[i],
                    preferred_element_type=jnp.float32) + b_ref[i:i + 1, :],
            0.0)
    head = (jnp.dot(h.astype(jnp.bfloat16), w_ref[num_layers],
                    preferred_element_type=jnp.float32)
            + b_ref[num_layers:num_layers + 1, :])             # (TB, D)
    mu = head[:, :Z]
    lv = head[:, Z:2 * Z]
    z = mu + eps_ref[...] * jnp.exp(0.5 * lv)                  # f32 VPU/EUP math
    # single lane-dense output tile; one writeback DMA
    out_ref[...] = jnp.zeros_like(out_ref)
    out_ref[:, 0:Z] = z
    out_ref[:, Z:2 * Z] = mu
    out_ref[:, 2 * Z:3 * Z] = lv


# ----------------------------------------------------------------------------
# Wrapper
# ----------------------------------------------------------------------------
_VMEM_SPEC = pl.BlockSpec(memory_space=pltpu.MemorySpace.VMEM)


def text_encoder_forward(packed, x_ncl, eps, *, batch_tile=128):
    """x_ncl: (B, num_characters, seq_length) -- same layout as PyTorch module."""
    B = x_ncl.shape[0]
    Z = packed['latent_dim']
    nl = packed['num_layers']
    D = packed['d_pad']
    d0 = packed['d_in']
    # torch-style NCL flatten == contiguous reshape (free); the NCL->NLC
    # permutation was folded into layer-1 weight rows.  Zero-pad to the
    # uniform tile width D (pad columns hit zero weight rows -> no effect).
    x_flat = x_ncl.reshape(B, -1).astype(jnp.float32)
    x_pad = jnp.pad(x_flat, ((0, 0), (0, D - d0)))
    eps = eps.astype(jnp.float32)

    kernel = functools.partial(fused_text_encoder_kernel,
                               num_layers=nl, latent_dim=Z)
    cost = pl.CostEstimate(
        flops=2 * B * D * D * (nl + 1),
        transcendentals=B * Z,
        bytes_accessed=(x_pad.size * 4 + packed['w_all'].size * 2
                        + packed['b_all'].size * 4 + eps.size * 4 + B * D * 4))
    out_shape = jax.ShapeDtypeStruct((B, D), jnp.float32)

    if B <= batch_tile:
        # Tiny batch: single grid-less call, everything resident in VMEM.
        out_slab = pl.pallas_call(
            kernel,
            out_shape=out_shape,
            in_specs=[_VMEM_SPEC] * 4,
            out_specs=_VMEM_SPEC,
            cost_estimate=cost,
        )(x_pad, packed['w_all'], packed['b_all'], eps)
    else:
        # Large batch: grid over B; weights/biases use a constant index_map so
        # they are fetched once and stay VMEM-resident across grid steps.
        TB = batch_tile
        out_slab = pl.pallas_call(
            kernel,
            out_shape=out_shape,
            grid_spec=pltpu.PrefetchScalarGridSpec(
                num_scalar_prefetch=0,
                grid=(pl.cdiv(B, TB),),
                in_specs=[
                    pl.BlockSpec((TB, D), lambda b: (b, 0)),            # x
                    pl.BlockSpec((nl + 1, D, D), lambda b: (0, 0, 0)),  # weights
                    pl.BlockSpec((nl + 1, D), lambda b: (0, 0)),        # biases
                    pl.BlockSpec((TB, Z), lambda b: (b, 0)),            # eps
                ],
                out_specs=pl.BlockSpec((TB, D), lambda b: (b, 0)),
            ),
            compiler_params=pltpu.CompilerParams(
                dimension_semantics=("parallel",)),   # v7x: use both TCs
            cost_estimate=cost,
        )(x_pad, packed['w_all'], packed['b_all'], eps)

    z = out_slab[:, 0:Z]
    mu = out_slab[:, Z:2 * Z]
    logvar = out_slab[:, 2 * Z:3 * Z]
    return z, mu, logvar


# ----------------------------------------------------------------------------
# Offline weight preparation (PyTorch layouts -> packed kernel buffers)
# ----------------------------------------------------------------------------
def _conv1d_as_matmul(w_torch, L):
    """Fold a PyTorch Conv1d weight (Cout, Cin, K), stride 1, padding K//2,
    into a banded matrix M of shape (L*Cin, L*Cout) acting on the
    NLC-flattened activation: (flat_nlc @ M)[l*Cout + co] == conv(x)[co, l]."""
    w = np.asarray(w_torch, np.float32)
    cout, cin, k = w.shape
    assert k % 2 == 1, "even kernel sizes change the output length in PyTorch"
    pad = k // 2
    m = np.zeros((L * cin, L * cout), np.float32)
    for lo in range(L):
        for t in range(k):
            li = lo + t - pad
            if 0 <= li < L:
                m[li * cin:(li + 1) * cin, lo * cout:(lo + 1) * cout] = w[:, :, t].T
    return m


def pack_weights(params, tw):
    """Convert PyTorch-layout weights into the fused kernel's packed buffers."""
    L = params['seq_length']
    nl = params['num_conv_layers']
    Z = params['latent_dimensions']
    filters = [params['num_characters'], params['layer1_filters'],
               params['layer2_filters'], params['layer3_filters'],
               params['layer4_filters']]
    d_list = [filters[i] * L for i in range(nl + 1)]         # flattened dim per stage
    d_pad = max(128, -(-max(d_list) // 128) * 128)           # lane-dense padding

    # (nl+1) stacked weight tiles: conv layers 0..nl-1, FC head at index nl.
    w_all = np.zeros((nl + 1, d_pad, d_pad), np.float32)
    b_all = np.zeros((nl + 1, d_pad), np.float32)
    for i in range(nl):
        m = _conv1d_as_matmul(tw[f'conv{i + 1}_w'], L)       # (L*Cin, L*Cout)
        if i == 0:
            # Fold the input NCL->NLC permutation into layer-1 weight rows so
            # the kernel consumes the plain reshape(B, -1) of the NCL input.
            cin0 = filters[0]
            perm_in = np.arange(L * cin0).reshape(L, cin0).T.reshape(-1)
            m = m[perm_in, :]
        w_all[i, :m.shape[0], :m.shape[1]] = m
        b = np.asarray(tw[f'conv{i + 1}_b'], np.float32)
        b_all[i, :L * b.size] = np.tile(b, L)

    # FC head: fold the torch.flatten(NCL) permutation into the weight rows,
    # put mu weights in lanes [0:Z] and logvar weights in lanes [Z:2Z].
    c_last = filters[nl]
    d_fc = c_last * L
    perm_fc = np.arange(d_fc).reshape(c_last, L).T.reshape(-1)   # [l*C+c] -> c*L+l
    w_all[nl, :d_fc, 0:Z] = np.asarray(tw['fc_mu_w'], np.float32)[:, perm_fc].T
    w_all[nl, :d_fc, Z:2 * Z] = np.asarray(tw['fc_logvar_w'], np.float32)[:, perm_fc].T
    b_all[nl, 0:Z] = np.asarray(tw['fc_mu_b'], np.float32)
    b_all[nl, Z:2 * Z] = np.asarray(tw['fc_logvar_b'], np.float32)

    return dict(
        w_all=jnp.asarray(w_all, jnp.bfloat16),   # MXU-native, halves weight DMA
        b_all=jnp.asarray(b_all, jnp.float32),    # VPU-side math stays f32 (v5e)
        num_layers=nl, latent_dim=Z, d_pad=d_pad, d_in=d_list[0])


def make_torch_weights(params, key):
    """Random weights in PyTorch layouts (Conv1d: (Cout,Cin,K), Linear: (out,in))."""
    ks = jax.random.split(key, 12)
    filters = [params['num_characters'], params['layer1_filters'],
               params['layer2_filters'], params['layer3_filters'],
               params['layer4_filters']]
    ksizes = [params['kernel1_size'], params['kernel2_size'],
              params['kernel3_size'], params['kernel4_size']]
    w = {}
    ki = 0
    for i in range(4):
        cin, cout, kk = filters[i], filters[i + 1], ksizes[i]
        w[f'conv{i + 1}_w'] = 0.1 * jax.random.normal(ks[ki], (cout, cin, kk), jnp.float32)
        w[f'conv{i + 1}_b'] = 0.1 * jax.random.normal(ks[ki + 1], (cout,), jnp.float32)
        ki += 2
    d_in = filters[params['num_conv_layers']] * params['seq_length']
    z = params['latent_dimensions']
    w['fc_mu_w'] = 0.05 * jax.random.normal(ks[ki], (z, d_in), jnp.float32)
    w['fc_mu_b'] = 0.05 * jax.random.normal(ks[ki + 1], (z,), jnp.float32)
    w['fc_logvar_w'] = 0.05 * jax.random.normal(ks[ki + 2], (z, d_in), jnp.float32)
    w['fc_logvar_b'] = 0.05 * jax.random.normal(ks[ki + 3], (z,), jnp.float32)
    return w


# ----------------------------------------------------------------------------
# Plain-JAX reference (direct port of the PyTorch forward) for validation
# ----------------------------------------------------------------------------
def reference_forward(params, tw, x_ncl, eps):
    h = x_ncl.astype(jnp.float32)
    for i in range(params['num_conv_layers']):
        w = tw[f'conv{i + 1}_w']
        b = tw[f'conv{i + 1}_b']
        pad = w.shape[-1] // 2
        h = jax.lax.conv_general_dilated(
            h, w, window_strides=(1,), padding=[(pad, pad)],
            dimension_numbers=('NCH', 'OIH', 'NCH'),
            precision=jax.lax.Precision.HIGHEST)
        h = jax.nn.relu(h + b[None, :, None])
    flat = h.reshape(h.shape[0], -1)                          # torch.flatten on NCL
    mu = jnp.dot(flat, tw['fc_mu_w'].T,
                 precision=jax.lax.Precision.HIGHEST) + tw['fc_mu_b']
    lv = jnp.dot(flat, tw['fc_logvar_w'].T,
                 precision=jax.lax.Precision.HIGHEST) + tw['fc_logvar_b']
    z = mu + eps * jnp.exp(0.5 * lv)
    return z, mu, lv


if __name__ == "__main__":
    params = dict(
        num_characters=4, seq_length=16, num_conv_layers=4,
        layer1_filters=8, layer2_filters=8, layer3_filters=8, layer4_filters=8,
        kernel1_size=3, kernel2_size=3, kernel3_size=3, kernel4_size=3,
        latent_dimensions=8,
    )
    key = jax.random.PRNGKey(0)
    k_x, k_w, k_eps, k_xb, k_eb = jax.random.split(key, 5)

    torch_w = make_torch_weights(params, k_w)
    packed = pack_weights(params, torch_w)

    def run_and_check(x, eps, rtol=2e-2, atol=2e-2):
        z, mu, lv = text_encoder_forward(packed, x, eps)
        jax.block_until_ready((z, mu, lv))
        z_r, mu_r, lv_r = reference_forward(params, torch_w, x, eps)
        np.testing.assert_allclose(np.asarray(mu), np.asarray(mu_r), rtol=rtol, atol=atol)
        np.testing.assert_allclose(np.asarray(lv), np.asarray(lv_r), rtol=rtol, atol=atol)
        np.testing.assert_allclose(np.asarray(z), np.asarray(z_r), rtol=rtol, atol=atol)
        return z, mu, lv

    # --- small batch: grid-less fused path -----------------------------------
    B = 2
    x = jax.random.uniform(k_x, (B, params['num_characters'], params['seq_length']),
                           jnp.float32)
    # torch.rand_like -> uniform [0, 1) noise
    eps = jax.random.uniform(k_eps, (B, params['latent_dimensions']), jnp.float32)
    z, mu, logvar = run_and_check(x, eps)
    assert z.shape == (B, params['latent_dimensions'])
    assert mu.shape == (B, params['latent_dimensions'])
    assert logvar.shape == (B, params['latent_dimensions'])

    # --- large batch: batch-grid path with VMEM-resident weights -------------
    Bb = 256
    xb = jax.random.uniform(k_xb, (Bb, params['num_characters'], params['seq_length']),
                            jnp.float32)
    epsb = jax.random.uniform(k_eb, (Bb, params['latent_dimensions']), jnp.float32)
    run_and_check(xb, epsb)

    print("KERNEL_OK")
</pallas_src>

<mosaic_0001>
module attributes {stable_mosaic.version = 11 : i64} {
  func.func @fused_text_encoder_kernel(%arg0: memref<2x128xf32, #tpu.memory_space<vmem>>, %arg1: memref<5x128x128xbf16, #tpu.memory_space<vmem>>, %arg2: memref<5x128xf32, #tpu.memory_space<vmem>>, %arg3: memref<2x8xf32, #tpu.memory_space<vmem>>, %arg4: memref<2x128xf32, #tpu.memory_space<vmem>>) attributes {dimension_semantics = [], scalar_prefetch = 0 : i64, scratch_operands = 0 : i64, tpu.core_type = #tpu.core_type<tc>} {
    %c0 = arith.constant 0 : index
    %c0_0 = arith.constant 0 : index
    %0 = vector.load %arg0[%c0, %c0_0] : memref<2x128xf32, #tpu.memory_space<vmem>>, vector<2x128xf32>
    %1 = arith.truncf %0 : vector<2x128xf32> to vector<2x128xbf16>
    %c0_1 = arith.constant 0 : index
    %c0_2 = arith.constant 0 : index
    %c0_3 = arith.constant 0 : index
    %2 = vector.load %arg1[%c0_1, %c0_2, %c0_3] : memref<5x128x128xbf16, #tpu.memory_space<vmem>>, vector<1x128x128xbf16>
    %3 = vector.shape_cast %2 : vector<1x128x128xbf16> to vector<128x128xbf16>
    %cst = arith.constant dense<0.000000e+00> : vector<2x128xf32>
    %4 = tpu.matmul %1, %3, %cst {dimension_numbers = #tpu.dot_dimension_numbers<[1], [0], [0], [1], [0, 0, 1, 1], [], []>} : vector<2x128xbf16>, vector<128x128xbf16>, vector<2x128xf32> -> vector<2x128xf32>
    %c0_4 = arith.constant 0 : index
    %c0_5 = arith.constant 0 : index
    %5 = vector.load %arg2[%c0_4, %c0_5] : memref<5x128xf32, #tpu.memory_space<vmem>>, vector<1x128xf32>
    %6 = vector.broadcast %5 : vector<1x128xf32> to vector<2x128xf32>
    %7 = arith.addf %4, %6 : vector<2x128xf32>
    %cst_6 = arith.constant 0.000000e+00 : f32
    %8 = vector.broadcast %cst_6 : f32 to vector<2x128xf32>
    %9 = arith.maximumf %7, %8 : vector<2x128xf32>
    %10 = arith.truncf %9 : vector<2x128xf32> to vector<2x128xbf16>
    %c1 = arith.constant 1 : index
    %c0_7 = arith.constant 0 : index
    %c0_8 = arith.constant 0 : index
    %11 = vector.load %arg1[%c1, %c0_7, %c0_8] : memref<5x128x128xbf16, #tpu.memory_space<vmem>>, vector<1x128x128xbf16>
    %12 = vector.shape_cast %11 : vector<1x128x128xbf16> to vector<128x128xbf16>
    %cst_9 = arith.constant dense<0.000000e+00> : vector<2x128xf32>
    %13 = tpu.matmul %10, %12, %cst_9 {dimension_numbers = #tpu.dot_dimension_numbers<[1], [0], [0], [1], [0, 0, 1, 1], [], []>} : vector<2x128xbf16>, vector<128x128xbf16>, vector<2x128xf32> -> vector<2x128xf32>
    %c1_10 = arith.constant 1 : index
    %c0_11 = arith.constant 0 : index
    %14 = vector.load %arg2[%c1_10, %c0_11] : memref<5x128xf32, #tpu.memory_space<vmem>>, vector<1x128xf32>
    %15 = vector.broadcast %14 : vector<1x128xf32> to vector<2x128xf32>
    %16 = arith.addf %13, %15 : vector<2x128xf32>
    %cst_12 = arith.constant 0.000000e+00 : f32
    %17 = vector.broadcast %cst_12 : f32 to vector<2x128xf32>
    %18 = arith.maximumf %16, %17 : vector<2x128xf32>
    %19 = arith.truncf %18 : vector<2x128xf32> to vector<2x128xbf16>
    %c2 = arith.constant 2 : index
    %c0_13 = arith.constant 0 : index
    %c0_14 = arith.constant 0 : index
    %20 = vector.load %arg1[%c2, %c0_13, %c0_14] : memref<5x128x128xbf16, #tpu.memory_space<vmem>>, vector<1x128x128xbf16>
    %21 = vector.shape_cast %20 : vector<1x128x128xbf16> to vector<128x128xbf16>
    %cst_15 = arith.constant dense<0.000000e+00> : vector<2x128xf32>
    %22 = tpu.matmul %19, %21, %cst_15 {dimension_numbers = #tpu.dot_dimension_numbers<[1], [0], [0], [1], [0, 0, 1, 1], [], []>} : vector<2x128xbf16>, vector<128x128xbf16>, vector<2x128xf32> -> vector<2x128xf32>
    %c2_16 = arith.constant 2 : index
    %c0_17 = arith.constant 0 : index
    %23 = vector.load %arg2[%c2_16, %c0_17] : memref<5x128xf32, #tpu.memory_space<vmem>>, vector<1x128xf32>
    %24 = vector.broadcast %23 : vector<1x128xf32> to vector<2x128xf32>
    %25 = arith.addf %22, %24 : vector<2x128xf32>
    %cst_18 = arith.constant 0.000000e+00 : f32
    %26 = vector.broadcast %cst_18 : f32 to vector<2x128xf32>
    %27 = arith.maximumf %25, %26 : vector<2x128xf32>
    %28 = arith.truncf %27 : vector<2x128xf32> to vector<2x128xbf16>
    %c3 = arith.constant 3 : index
    %c0_19 = arith.constant 0 : index
    %c0_20 = arith.constant 0 : index
    %29 = vector.load %arg1[%c3, %c0_19, %c0_20] : memref<5x128x128xbf16, #tpu.memory_space<vmem>>, vector<1x128x128xbf16>
    %30 = vector.shape_cast %29 : vector<1x128x128xbf16> to vector<128x128xbf16>
    %cst_21 = arith.constant dense<0.000000e+00> : vector<2x128xf32>
    %31 = tpu.matmul %28, %30, %cst_21 {dimension_numbers = #tpu.dot_dimension_numbers<[1], [0], [0], [1], [0, 0, 1, 1], [], []>} : vector<2x128xbf16>, vector<128x128xbf16>, vector<2x128xf32> -> vector<2x128xf32>
    %c3_22 = arith.constant 3 : index
    %c0_23 = arith.constant 0 : index
    %32 = vector.load %arg2[%c3_22, %c0_23] : memref<5x128xf32, #tpu.memory_space<vmem>>, vector<1x128xf32>
    %33 = vector.broadcast %32 : vector<1x128xf32> to vector<2x128xf32>
    %34 = arith.addf %31, %33 : vector<2x128xf32>
    %cst_24 = arith.constant 0.000000e+00 : f32
    %35 = vector.broadcast %cst_24 : f32 to vector<2x128xf32>
    %36 = arith.maximumf %34, %35 : vector<2x128xf32>
    %37 = arith.truncf %36 : vector<2x128xf32> to vector<2x128xbf16>
    %c4 = arith.constant 4 : index
    %c0_25 = arith.constant 0 : index
    %c0_26 = arith.constant 0 : index
    %38 = vector.load %arg1[%c4, %c0_25, %c0_26] : memref<5x128x128xbf16, #tpu.memory_space<vmem>>, vector<1x128x128xbf16>
    %39 = vector.shape_cast %38 : vector<1x128x128xbf16> to vector<128x128xbf16>
    %cst_27 = arith.constant dense<0.000000e+00> : vector<2x128xf32>
    %40 = tpu.matmul %37, %39, %cst_27 {dimension_numbers = #tpu.dot_dimension_numbers<[1], [0], [0], [1], [0, 0, 1, 1], [], []>} : vector<2x128xbf16>, vector<128x128xbf16>, vector<2x128xf32> -> vector<2x128xf32>
    %c4_28 = arith.constant 4 : index
    %c0_29 = arith.constant 0 : index
    %41 = vector.load %arg2[%c4_28, %c0_29] : memref<5x128xf32, #tpu.memory_space<vmem>>, vector<1x128xf32>
    %42 = vector.broadcast %41 : vector<1x128xf32> to vector<2x128xf32>
    %43 = arith.addf %40, %42 : vector<2x128xf32>
    %44 = vector.extract_strided_slice %43 {offsets = [0, 0], sizes = [2, 8], strides = [1, 1]} : vector<2x128xf32> to vector<2x8xf32>
    %45 = vector.extract_strided_slice %43 {offsets = [0, 8], sizes = [2, 8], strides = [1, 1]} : vector<2x128xf32> to vector<2x8xf32>
    %c0_30 = arith.constant 0 : index
    %c0_31 = arith.constant 0 : index
    %46 = vector.load %arg3[%c0_30, %c0_31] : memref<2x8xf32, #tpu.memory_space<vmem>>, vector<2x8xf32>
    %cst_32 = arith.constant 5.000000e-01 : f32
    %47 = vector.broadcast %cst_32 : f32 to vector<2x8xf32>
    %48 = arith.mulf %47, %45 : vector<2x8xf32>
    %49 = math.exp %48 : vector<2x8xf32>
    %50 = arith.mulf %46, %49 : vector<2x8xf32>
    %51 = arith.addf %44, %50 : vector<2x8xf32>
    %cst_33 = arith.constant 0.000000e+00 : f32
    %52 = vector.broadcast %cst_33 : f32 to vector<2x128xf32>
    %c0_34 = arith.constant 0 : index
    %c0_35 = arith.constant 0 : index
    %53 = vector.load %arg4[%c0_34, %c0_35] : memref<2x128xf32, #tpu.memory_space<vmem>>, vector<2x128xf32>
    tpu.vector_store %arg4[%c0_34, %c0_35], %52 {strides = array<i32>} : memref<2x128xf32, #tpu.memory_space<vmem>>, vector<2x128xf32>,
    %c0_36 = arith.constant 0 : index
    %c0_37 = arith.constant 0 : index
    %54 = vector.load %arg4[%c0_36, %c0_37] : memref<2x128xf32, #tpu.memory_space<vmem>>, vector<2x8xf32>
    tpu.vector_store %arg4[%c0_36, %c0_37], %51 {strides = array<i32>} : memref<2x128xf32, #tpu.memory_space<vmem>>, vector<2x8xf32>,
    %c0_38 = arith.constant 0 : index
    %c8 = arith.constant 8 : index
    %55 = vector.load %arg4[%c0_38, %c8] : memref<2x128xf32, #tpu.memory_space<vmem>>, vector<2x8xf32>
    tpu.vector_store %arg4[%c0_38, %c8], %44 {strides = array<i32>} : memref<2x128xf32, #tpu.memory_space<vmem>>, vector<2x8xf32>,
    %c0_39 = arith.constant 0 : index
    %c16 = arith.constant 16 : index
    %56 = vector.load %arg4[%c0_39, %c16] : memref<2x128xf32, #tpu.memory_space<vmem>>, vector<2x8xf32>
    tpu.vector_store %arg4[%c0_39, %c16], %45 {strides = array<i32>} : memref<2x128xf32, #tpu.memory_space<vmem>>, vector<2x8xf32>,
    return
  }
}

</mosaic_0001>

<llo_original>
// kernel: tpu_custom_call.1
$region0: #{tpu_custom_call.1}
  #allocation0 [shape = 'u32[]', space=smem, size = 0x4, offset = 0x4, fixed_abs, tag = 'smem constant byte address 0x4 - core index']
  #allocation1 [shape = 'u32[144,128]{1,0:T(1,128)}', space=vmem, size = 0x12000, scoped, tag = 'internal scratch']
  %s0 = inlined_call_operand.hbm [shape: f32[2,128], index: 0, kind: input, shape index: {}]
  %s1 = inlined_call_operand.hbm [shape: bf16[5,128,128], index: 1, kind: input, shape index: {}]
  %s2 = inlined_call_operand.hbm [shape: f32[5,128], index: 2, kind: input, shape index: {}]
  %s3 = inlined_call_operand.vmem [shape: f32[2,8], index: 3, kind: input, shape index: {}]
  %s4 = inlined_call_operand.hbm [shape: f32[2,128], index: 4, kind: output, shape index: {}]
  %s5 = sld [smem:[#allocation0]]
  $region38: #{tpu_custom_call.1} parent=0
    _
  %s7 = ssub.s32 1, %s5
  %s8 = scalar_select 0, %s7, %s5
  $region1: #{tpu_custom_call.1} parent=0
    #allocation2 [shape = 'u8[1024]{0}', space=vmem, size = 0x400, scoped, tag = 'input window, operand 0, single buffered']
    #allocation3 [shape = 's32[1]{0}', space=sflag, size = 0x4, scoped, tag = 'scoped memory for tpu_custom_call.1']
    #allocation4 [shape = 's32[1]{0}', space=sflag, size = 0x4, scoped, tag = 'scoped memory for tpu_custom_call.1']
    #allocation5 [shape = 'u8[163840]{0}', space=vmem, size = 0x28000, scoped, tag = 'input window, operand 1, single buffered']
    #allocation6 [shape = 's32[1]{0}', space=sflag, size = 0x4, scoped, tag = 'scoped memory for tpu_custom_call.1']
    #allocation7 [shape = 'u8[4096]{0}', space=vmem, size = 0x1000, scoped, tag = 'input window, operand 2, single buffered']
    #allocation8 [shape = 'u8[1024]{0}', space=vmem, size = 0x400, scoped, tag = 'output window, operand 0, single buffered']
    %9 = vsyncpa [#allocation3], 0
    %10 = vsyncpa [#allocation6], 0
    %11 = vsyncpa [#allocation4], 0
    // Predicated region
    $region2: #{tpu_custom_call.1} parent=1 // pred_check
      _
    $region3: #{tpu_custom_call.1} parent=1 // pred_check_branch
      %13 = sbr.rel (0) target = $region5
    $region4: #{tpu_custom_call.1} parent=1 // pred_region
      %s15 = ssub.s32 32, 32
      %16 = vsyncadd [#allocation3], %s15
      %s18 = sshll.u32 [#allocation2], 4
      %s19 = int_to_ptr.vmem [resolvable:$true] %s18
      %21 = dma.hbm_to_vmem [thread:$0]  %s0, 32, %s19, [#allocation3]
    $region5: #{tpu_custom_call.1} parent=1 // pred_fallthru
      _
    // Predicated region
    $region6: #{tpu_custom_call.1} parent=1 // pred_check
      _
    $region7: #{tpu_custom_call.1} parent=1 // pred_check_branch
      %23 = sbr.rel (0) target = $region9
    $region8: #{tpu_custom_call.1} parent=1 // pred_region
      %s25 = ssub.s32 5120, 5120
      %26 = vsyncadd [#allocation6], %s25
      %s27 = sshll.u32 [#allocation5], 4
      %s28 = int_to_ptr.vmem [resolvable:$true] %s27
      %33 = dma.hbm_to_vmem [thread:$0]  %s1, 5120, %s28, [#allocation6], 64, 64, 4
    $region9: #{tpu_custom_call.1} parent=1 // pred_fallthru
      _
    // Predicated region
    $region10: #{tpu_custom_call.1} parent=1 // pred_check
      _
    $region11: #{tpu_custom_call.1} parent=1 // pred_check_branch
      %35 = sbr.rel (0) target = $region13
    $region12: #{tpu_custom_call.1} parent=1 // pred_region
      %s37 = ssub.s32 128, 128
      %38 = vsyncadd [#allocation6], %s37
      %s40 = sshll.u32 [#allocation7], 4
      %s41 = int_to_ptr.vmem [resolvable:$true] %s40
      %43 = dma.hbm_to_vmem [thread:$0]  %s2, 128, %s41, [#allocation6]
    $region13: #{tpu_custom_call.1} parent=1 // pred_fallthru
      _
    // Predicated region
    $region14: #{tpu_custom_call.1} parent=1 // pred_check
      _
    $region15: #{tpu_custom_call.1} parent=1 // pred_check_branch
      %45 = sbr.rel (0) target = $region17
    $region16: #{tpu_custom_call.1} parent=1 // pred_region
      _
    $region17: #{tpu_custom_call.1} parent=1 // pred_fallthru
      _
    // Predicated region
    $region18: #{tpu_custom_call.1} parent=1 // pred_check
      _
    $region19: #{tpu_custom_call.1} parent=1 // pred_check_branch
      %47 = sbr.rel (0) target = $region21
    $region20: #{tpu_custom_call.1} parent=1 // pred_region
      %48 = dma.done [#allocation3], 32
    $region21: #{tpu_custom_call.1} parent=1 // pred_fallthru
      _
    // Predicated region
    $region22: #{tpu_custom_call.1} parent=1 // pred_check
      _
    $region23: #{tpu_custom_call.1} parent=1 // pred_check_branch
      %50 = sbr.rel (0) target = $region25
    $region24: #{tpu_custom_call.1} parent=1 // pred_region
      %51 = dma.done [#allocation6], 5120
    $region25: #{tpu_custom_call.1} parent=1 // pred_fallthru
      _
    // Predicated region
    $region26: #{tpu_custom_call.1} parent=1 // pred_check
      _
    $region27: #{tpu_custom_call.1} parent=1 // pred_check_branch
      %53 = sbr.rel (0) target = $region29
    $region28: #{tpu_custom_call.1} parent=1 // pred_region
      %54 = dma.done [#allocation6], 128
    $region29: #{tpu_custom_call.1} parent=1 // pred_fallthru
      _
    %v56 = vld [vmem:[#allocation2] sm:$0x3]
    %v57 = vpack.c.bf16 %v56, %v56
    %v58 = vld [vmem:[#allocation5] sm:$0xf]
    %v59 = vld [vmem:[#allocation5 + $0x4] sm:$0xf]
    %v60 = vld [vmem:[#allocation5 + $0x8] sm:$0xf]
    %v61 = vld [vmem:[#allocation5 + $0xc] sm:$0xf]
    %v62 = vld [vmem:[#allocation5 + $0x10] sm:$0xf]
    %v63 = vld [vmem:[#allocation5 + $0x14] sm:$0xf]
    %v64 = vld [vmem:[#allocation5 + $0x18] sm:$0xf]
    %v65 = vld [vmem:[#allocation5 + $0x1c] sm:$0xf]
    %v66 = vld [vmem:[#allocation5 + $0x20] sm:$0xf]
    %v67 = vld [vmem:[#allocation5 + $0x24] sm:$0xf]
    %v68 = vld [vmem:[#allocation5 + $0x28] sm:$0xf]
    %v69 = vld [vmem:[#allocation5 + $0x2c] sm:$0xf]
    %v70 = vld [vmem:[#allocation5 + $0x30] sm:$0xf]
    %v71 = vld [vmem:[#allocation5 + $0x34] sm:$0xf]
    %v72 = vld [vmem:[#allocation5 + $0x38] sm:$0xf]
    %v73 = vld [vmem:[#allocation5 + $0x3c] sm:$0xf]
    %v74 = vld [vmem:[#allocation7] sm:$0x1]
    %v75 = vlaneseq
    %v76 = vshrl.u32 %v75, 7
    %v77 = vsub.s32 0, %v76
    %v78 = vrot.slane %v74, %v77
    %v95 = vunpack.c.l.b16 %v58
    %v96 = vunpack.c.l.b16 %v59
    %v97 = vunpack.c.l.b16 %v60
    %v98 = vunpack.c.l.b16 %v61
    %v99 = vunpack.c.l.b16 %v62
    %v100 = vunpack.c.l.b16 %v63
    %v101 = vunpack.c.l.b16 %v64
    %v102 = vunpack.c.l.b16 %v65
    %v103 = vunpack.c.l.b16 %v66
    %v104 = vunpack.c.l.b16 %v67
    %v105 = vunpack.c.l.b16 %v68
    %v106 = vunpack.c.l.b16 %v69
    %v107 = vunpack.c.l.b16 %v70
    %v108 = vunpack.c.l.b16 %v71
    %v109 = vunpack.c.l.b16 %v72
    %v110 = vunpack.c.l.b16 %v73
    %v111 = vpack.c.b16 %v96, %v95
    %v112 = vpack.c.b16 %v98, %v97
    %v113 = vpack.c.b16 %v100, %v99
    %v114 = vpack.c.b16 %v102, %v101
    %v115 = vpack.c.b16 %v104, %v103
    %v116 = vpack.c.b16 %v106, %v105
    %v117 = vpack.c.b16 %v108, %v107
    %v118 = vpack.c.b16 %v110, %v109
    %127 = vmatprep.subr.bf16.mxu0 0
    %128 = vmatpush1.bf16.msra.mxu0 %v118
    %129 = vmatprep.subr.bf16.mxu0 0
    %130 = vmatpush1.bf16.msra.mxu0 %v117
    %131 = vmatprep.subr.bf16.mxu0 0
    %132 = vmatpush1.bf16.msra.mxu0 %v116
    %133 = vmatprep.subr.bf16.mxu0 0
    %134 = vmatpush1.bf16.msra.mxu0 %v115
    %135 = vmatprep.subr.bf16.mxu0 0
    %136 = vmatpush1.bf16.msra.mxu0 %v114
    %137 = vmatprep.subr.bf16.mxu0 0
    %138 = vmatpush1.bf16.msra.mxu0 %v113
    %139 = vmatprep.subr.bf16.mxu0 0
    %140 = vmatpush1.bf16.msra.mxu0 %v112
    %141 = vmatprep.subr.bf16.mxu0 0
    %142 = vmatpush1.bf16.msra.mxu0 %v111
    %143 = vmatprep.subr.bf16.mxu0 0
    %144 = vmatpush2.bf16.msra.mxu0 0
    %145 = vmatprep.subr.bf16.mxu0 0
    %146 = vmatpush2.bf16.msra.mxu0 0
    %147 = vmatprep.subr.bf16.mxu0 0
    %148 = vmatpush2.bf16.msra.mxu0 0
    %149 = vmatprep.subr.bf16.mxu0 0
    %150 = vmatpush2.bf16.msra.mxu0 0
    %151 = vmatprep.subr.bf16.mxu0 0
    %152 = vmatpush2.bf16.msra.mxu0 0
    %153 = vmatprep.subr.bf16.mxu0 0
    %154 = vmatpush2.bf16.msra.mxu0 0
    %155 = vmatprep.subr.bf16.mxu0 0
    %156 = vmatpush2.bf16.msra.mxu0 0
    %157 = vmatprep.subr.bf16.mxu0 0
    %158 = vmatpush2.bf16.msra.mxu0 0
    %159 = vmatprep.mubr.bf16.mxu0 0
    %160 = vmatmul.mubr.bf16.gmra.mxu0 %v57
    %v161 = vpop.f32.mrf.mxu0
    %v162 = vadd.f32 %v78, %v161
    %v163 = vpop.f32.mrf.mxu0
    %v164 = vpop.f32.mrf.mxu0
    %v165 = vpop.f32.mrf.mxu0
    %166 = vdwg.mxu0
    %v167 = vmax.f32 %v162, 0.0
    %v168 = vpack.c.bf16 %v167, %v167
    %s169 = scalar_lea.vmem [#allocation5], 64
    %v170 = vld [vmem:[%s169] sm:$0xf]
    %v171 = vld [vmem:[%s169 + $0x4] sm:$0xf]
    %v172 = vld [vmem:[%s169 + $0x8] sm:$0xf]
    %v173 = vld [vmem:[%s169 + $0xc] sm:$0xf]
    %v174 = vld [vmem:[%s169 + $0x10] sm:$0xf]
    %v175 = vld [vmem:[%s169 + $0x14] sm:$0xf]
    %v176 = vld [vmem:[%s169 + $0x18] sm:$0xf]
    %v177 = vld [vmem:[%s169 + $0x1c] sm:$0xf]
    %v178 = vld [vmem:[%s169 + $0x20] sm:$0xf]
    %v179 = vld [vmem:[%s169 + $0x24] sm:$0xf]
    %v180 = vld [vmem:[%s169 + $0x28] sm:$0xf]
    %v181 = vld [vmem:[%s169 + $0x2c] sm:$0xf]
    %v182 = vld [vmem:[%s169 + $0x30] sm:$0xf]
    %v183 = vld [vmem:[%s169 + $0x34] sm:$0xf]
    %v184 = vld [vmem:[%s169 + $0x38] sm:$0xf]
    %v185 = vld [vmem:[%s169 + $0x3c] sm:$0xf]
    %v186 = vld [vmem:[#allocation7 + $0x1] sm:$0x1]
    %v187 = vlaneseq
    %v188 = vshrl.u32 %v187, 7
    %v189 = vsub.s32 0, %v188
    %v190 = vrot.slane %v186, %v189
    %v207 = vunpack.c.l.b16 %v170
    %v208 = vunpack.c.l.b16 %v171
    %v209 = vunpack.c.l.b16 %v172
    %v210 = vunpack.c.l.b16 %v173
    %v211 = vunpack.c.l.b16 %v174
    %v212 = vunpack.c.l.b16 %v175
    %v213 = vunpack.c.l.b16 %v176
    %v214 = vunpack.c.l.b16 %v177
    %v215 = vunpack.c.l.b16 %v178
    %v216 = vunpack.c.l.b16 %v179
    %v217 = vunpack.c.l.b16 %v180
    %v218 = vunpack.c.l.b16 %v181
    %v219 = vunpack.c.l.b16 %v182
    %v220 = vunpack.c.l.b16 %v183
    %v221 = vunpack.c.l.b16 %v184
    %v222 = vunpack.c.l.b16 %v185
    %v223 = vpack.c.b16 %v208, %v207
    %v224 = vpack.c.b16 %v210, %v209
    %v225 = vpack.c.b16 %v212, %v211
    %v226 = vpack.c.b16 %v214, %v213
    %v227 = vpack.c.b16 %v216, %v215
    %v228 = vpack.c.b16 %v218, %v217
    %v229 = vpack.c.b16 %v220, %v219
    %v230 = vpack.c.b16 %v222, %v221
    %239 = vmatprep.subr.bf16.mxu0 0
    %240 = vmatpush1.bf16.msra.mxu0 %v230
    %241 = vmatprep.subr.bf16.mxu0 0
    %242 = vmatpush1.bf16.msra.mxu0 %v229
    %243 = vmatprep.subr.bf16.mxu0 0
    %244 = vmatpush1.bf16.msra.mxu0 %v228
    %245 = vmatprep.subr.bf16.mxu0 0
    %246 = vmatpush1.bf16.msra.mxu0 %v227
    %247 = vmatprep.subr.bf16.mxu0 0
    %248 = vmatpush1.bf16.msra.mxu0 %v226
    %249 = vmatprep.subr.bf16.mxu0 0
    %250 = vmatpush1.bf16.msra.mxu0 %v225
    %251 = vmatprep.subr.bf16.mxu0 0
    %252 = vmatpush1.bf16.msra.mxu0 %v224
    %253 = vmatprep.subr.bf16.mxu0 0
    %254 = vmatpush1.bf16.msra.mxu0 %v223
    %255 = vmatprep.subr.bf16.mxu0 0
    %256 = vmatpush2.bf16.msra.mxu0 0
    %257 = vmatprep.subr.bf16.mxu0 0
    %258 = vmatpush2.bf16.msra.mxu0 0
    %259 = vmatprep.subr.bf16.mxu0 0
    %260 = vmatpush2.bf16.msra.mxu0 0
    %261 = vmatprep.subr.bf16.mxu0 0
    %262 = vmatpush2.bf16.msra.mxu0 0
    %263 = vmatprep.subr.bf16.mxu0 0
    %264 = vmatpush2.bf16.msra.mxu0 0
    %265 = vmatprep.subr.bf16.mxu0 0
    %266 = vmatpush2.bf16.msra.mxu0 0
    %267 = vmatprep.subr.bf16.mxu0 0
    %268 = vmatpush2.bf16.msra.mxu0 0
    %269 = vmatprep.subr.bf16.mxu0 0
    %270 = vmatpush2.bf16.msra.mxu0 0
    %271 = vmatprep.mubr.bf16.mxu0 0
    %272 = vmatmul.mubr.bf16.gmra.mxu0 %v168
    %v273 = vpop.f32.mrf.mxu0
    %v274 = vadd.f32 %v190, %v273
    %v275 = vpop.f32.mrf.mxu0
    %v276 = vpop.f32.mrf.mxu0
    %v277 = vpop.f32.mrf.mxu0
    %278 = vdwg.mxu0
    %v279 = vmax.f32 %v274, 0.0
    %v280 = vpack.c.bf16 %v279, %v279
    %s281 = scalar_lea.vmem [#allocation5], 128
    %v282 = vld [vmem:[%s281] sm:$0xf]
    %v283 = vld [vmem:[%s281 + $0x4] sm:$0xf]
    %v284 = vld [vmem:[%s281 + $0x8] sm:$0xf]
    %v285 = vld [vmem:[%s281 + $0xc] sm:$0xf]
    %v286 = vld [vmem:[%s281 + $0x10] sm:$0xf]
    %v287 = vld [vmem:[%s281 + $0x14] sm:$0xf]
    %v288 = vld [vmem:[%s281 + $0x18] sm:$0xf]
    %v289 = vld [vmem:[%s281 + $0x1c] sm:$0xf]
    %v290 = vld [vmem:[%s281 + $0x20] sm:$0xf]
    %v291 = vld [vmem:[%s281 + $0x24] sm:$0xf]
    %v292 = vld [vmem:[%s281 + $0x28] sm:$0xf]
    %v293 = vld [vmem:[%s281 + $0x2c] sm:$0xf]
    %v294 = vld [vmem:[%s281 + $0x30] sm:$0xf]
    %v295 = vld [vmem:[%s281 + $0x34] sm:$0xf]
    %v296 = vld [vmem:[%s281 + $0x38] sm:$0xf]
    %v297 = vld [vmem:[%s281 + $0x3c] sm:$0xf]
    %v298 = vld [vmem:[#allocation7 + $0x2] sm:$0x1]
    %v299 = vlaneseq
    %v300 = vshrl.u32 %v299, 7
    %v301 = vsub.s32 0, %v300
    %v302 = vrot.slane %v298, %v301
    %v319 = vunpack.c.l.b16 %v282
    %v320 = vunpack.c.l.b16 %v283
    %v321 = vunpack.c.l.b16 %v284
    %v322 = vunpack.c.l.b16 %v285
    %v323 = vunpack.c.l.b16 %v286
    %v324 = vunpack.c.l.b16 %v287
    %v325 = vunpack.c.l.b16 %v288
    %v326 = vunpack.c.l.b16 %v289
    %v327 = vunpack.c.l.b16 %v290
    %v328 = vunpack.c.l.b16 %v291
    %v329 = vunpack.c.l.b16 %v292
    %v330 = vunpack.c.l.b16 %v293
    %v331 = vunpack.c.l.b16 %v294
    %v332 = vunpack.c.l.b16 %v295
    %v333 = vunpack.c.l.b16 %v296
    %v334 = vunpack.c.l.b16 %v297
    %v335 = vpack.c.b16 %v320, %v319
    %v336 = vpack.c.b16 %v322, %v321
    %v337 = vpack.c.b16 %v324, %v323
    %v338 = vpack.c.b16 %v326, %v325
    %v339 = vpack.c.b16 %v328, %v327
    %v340 = vpack.c.b16 %v330, %v329
    %v341 = vpack.c.b16 %v332, %v331
    %v342 = vpack.c.b16 %v334, %v333
    %351 = vmatprep.subr.bf16.mxu0 0
    %352 = vmatpush1.bf16.msra.mxu0 %v342
    %353 = vmatprep.subr.bf16.mxu0 0
    %354 = vmatpush1.bf16.msra.mxu0 %v341
    %355 = vmatprep.subr.bf16.mxu0 0
    %356 = vmatpush1.bf16.msra.mxu0 %v340
    %357 = vmatprep.subr.bf16.mxu0 0
    %358 = vmatpush1.bf16.msra.mxu0 %v339
    %359 = vmatprep.subr.bf16.mxu0 0
    %360 = vmatpush1.bf16.msra.mxu0 %v338
    %361 = vmatprep.subr.bf16.mxu0 0
    %362 = vmatpush1.bf16.msra.mxu0 %v337
    %363 = vmatprep.subr.bf16.mxu0 0
    %364 = vmatpush1.bf16.msra.mxu0 %v336
    %365 = vmatprep.subr.bf16.mxu0 0
    %366 = vmatpush1.bf16.msra.mxu0 %v335
    %367 = vmatprep.subr.bf16.mxu0 0
    %368 = vmatpush2.bf16.msra.mxu0 0
    %369 = vmatprep.subr.bf16.mxu0 0
    %370 = vmatpush2.bf16.msra.mxu0 0
    %371 = vmatprep.subr.bf16.mxu0 0
    %372 = vmatpush2.bf16.msra.mxu0 0
    %373 = vmatprep.subr.bf16.mxu0 0
    %374 = vmatpush2.bf16.msra.mxu0 0
    %375 = vmatprep.subr.bf16.mxu0 0
    %376 = vmatpush2.bf16.msra.mxu0 0
    %377 = vmatprep.subr.bf16.mxu0 0
    %378 = vmatpush2.bf16.msra.mxu0 0
    %379 = vmatprep.subr.bf16.mxu0 0
    %380 = vmatpush2.bf16.msra.mxu0 0
    %381 = vmatprep.subr.bf16.mxu0 0
    %382 = vmatpush2.bf16.msra.mxu0 0
    %383 = vmatprep.mubr.bf16.mxu0 0
    %384 = vmatmul.mubr.bf16.gmra.mxu0 %v280
    %v385 = vpop.f32.mrf.mxu0
    %v386 = vadd.f32 %v302, %v385
    %v387 = vpop.f32.mrf.mxu0
    %v388 = vpop.f32.mrf.mxu0
    %v389 = vpop.f32.mrf.mxu0
    %390 = vdwg.mxu0
    %v391 = vmax.f32 %v386, 0.0
    %v392 = vpack.c.bf16 %v391, %v391
    %s393 = scalar_lea.vmem [#allocation5], 192
    %v394 = vld [vmem:[%s393] sm:$0xf]
    %v395 = vld [vmem:[%s393 + $0x4] sm:$0xf]
    %v396 = vld [vmem:[%s393 + $0x8] sm:$0xf]
    %v397 = vld [vmem:[%s393 + $0xc] sm:$0xf]
    %v398 = vld [vmem:[%s393 + $0x10] sm:$0xf]
    %v399 = vld [vmem:[%s393 + $0x14] sm:$0xf]
    %v400 = vld [vmem:[%s393 + $0x18] sm:$0xf]
    %v401 = vld [vmem:[%s393 + $0x1c] sm:$0xf]
    %v402 = vld [vmem:[%s393 + $0x20] sm:$0xf]
    %v403 = vld [vmem:[%s393 + $0x24] sm:$0xf]
    %v404 = vld [vmem:[%s393 + $0x28] sm:$0xf]
    %v405 = vld [vmem:[%s393 + $0x2c] sm:$0xf]
    %v406 = vld [vmem:[%s393 + $0x30] sm:$0xf]
    %v407 = vld [vmem:[%s393 + $0x34] sm:$0xf]
    %v408 = vld [vmem:[%s393 + $0x38] sm:$0xf]
    %v409 = vld [vmem:[%s393 + $0x3c] sm:$0xf]
    %v410 = vld [vmem:[#allocation7 + $0x3] sm:$0x1]
    %v411 = vlaneseq
    %v412 = vshrl.u32 %v411, 7
    %v413 = vsub.s32 0, %v412
    %v414 = vrot.slane %v410, %v413
    %v431 = vunpack.c.l.b16 %v394
    %v432 = vunpack.c.l.b16 %v395
    %v433 = vunpack.c.l.b16 %v396
    %v434 = vunpack.c.l.b16 %v397
    %v435 = vunpack.c.l.b16 %v398
    %v436 = vunpack.c.l.b16 %v399
    %v437 = vunpack.c.l.b16 %v400
    %v438 = vunpack.c.l.b16 %v401
    %v439 = vunpack.c.l.b16 %v402
    %v440 = vunpack.c.l.b16 %v403
    %v441 = vunpack.c.l.b16 %v404
    %v442 = vunpack.c.l.b16 %v405
    %v443 = vunpack.c.l.b16 %v406
    %v444 = vunpack.c.l.b16 %v407
    %v445 = vunpack.c.l.b16 %v408
    %v446 = vunpack.c.l.b16 %v409
    %v447 = vpack.c.b16 %v432, %v431
    %v448 = vpack.c.b16 %v434, %v433
    %v449 = vpack.c.b16 %v436, %v435
    %v450 = vpack.c.b16 %v438, %v437
    %v451 = vpack.c.b16 %v440, %v439
    %v452 = vpack.c.b16 %v442, %v441
    %v453 = vpack.c.b16 %v444, %v443
    %v454 = vpack.c.b16 %v446, %v445
    %463 = vmatprep.subr.bf16.mxu0 0
    %464 = vmatpush1.bf16.msra.mxu0 %v454
    %465 = vmatprep.subr.bf16.mxu0 0
    %466 = vmatpush1.bf16.msra.mxu0 %v453
    %467 = vmatprep.subr.bf16.mxu0 0
    %468 = vmatpush1.bf16.msra.mxu0 %v452
    %469 = vmatprep.subr.bf16.mxu0 0
    %470 = vmatpush1.bf16.msra.mxu0 %v451
    %471 = vmatprep.subr.bf16.mxu0 0
    %472 = vmatpush1.bf16.msra.mxu0 %v450
    %473 = vmatprep.subr.bf16.mxu0 0
    %474 = vmatpush1.bf16.msra.mxu0 %v449
    %475 = vmatprep.subr.bf16.mxu0 0
    %476 = vmatpush1.bf16.msra.mxu0 %v448
    %477 = vmatprep.subr.bf16.mxu0 0
    %478 = vmatpush1.bf16.msra.mxu0 %v447
    %479 = vmatprep.subr.bf16.mxu0 0
    %480 = vmatpush2.bf16.msra.mxu0 0
    %481 = vmatprep.subr.bf16.mxu0 0
    %482 = vmatpush2.bf16.msra.mxu0 0
    %483 = vmatprep.subr.bf16.mxu0 0
    %484 = vmatpush2.bf16.msra.mxu0 0
    %485 = vmatprep.subr.bf16.mxu0 0
    %486 = vmatpush2.bf16.msra.mxu0 0
    %487 = vmatprep.subr.bf16.mxu0 0
    %488 = vmatpush2.bf16.msra.mxu0 0
    %489 = vmatprep.subr.bf16.mxu0 0
    %490 = vmatpush2.bf16.msra.mxu0 0
    %491 = vmatprep.subr.bf16.mxu0 0
    %492 = vmatpush2.bf16.msra.mxu0 0
    %493 = vmatprep.subr.bf16.mxu0 0
    %494 = vmatpush2.bf16.msra.mxu0 0
    %495 = vmatprep.mubr.bf16.mxu0 0
    %496 = vmatmul.mubr.bf16.gmra.mxu0 %v392
    %v497 = vpop.f32.mrf.mxu0
    %v498 = vadd.f32 %v414, %v497
    %v499 = vpop.f32.mrf.mxu0
    %v500 = vpop.f32.mrf.mxu0
    %v501 = vpop.f32.mrf.mxu0
    %502 = vdwg.mxu0
    %v503 = vmax.f32 %v498, 0.0
    %v504 = vpack.c.bf16 %v503, %v503
    %s505 = scalar_lea.vmem [#allocation5], 256
    %v506 = vld [vmem:[%s505] sm:$0xf]
    %v507 = vld [vmem:[%s505 + $0x4] sm:$0xf]
    %v508 = vld [vmem:[%s505 + $0x8] sm:$0xf]
    %v509 = vld [vmem:[%s505 + $0xc] sm:$0xf]
    %v510 = vld [vmem:[%s505 + $0x10] sm:$0xf]
    %v511 = vld [vmem:[%s505 + $0x14] sm:$0xf]
    %v512 = vld [vmem:[%s505 + $0x18] sm:$0xf]
    %v513 = vld [vmem:[%s505 + $0x1c] sm:$0xf]
    %v514 = vld [vmem:[%s505 + $0x20] sm:$0xf]
    %v515 = vld [vmem:[%s505 + $0x24] sm:$0xf]
    %v516 = vld [vmem:[%s505 + $0x28] sm:$0xf]
    %v517 = vld [vmem:[%s505 + $0x2c] sm:$0xf]
    %v518 = vld [vmem:[%s505 + $0x30] sm:$0xf]
    %v519 = vld [vmem:[%s505 + $0x34] sm:$0xf]
    %v520 = vld [vmem:[%s505 + $0x38] sm:$0xf]
    %v521 = vld [vmem:[%s505 + $0x3c] sm:$0xf]
    %v522 = vld [vmem:[#allocation7 + $0x4] sm:$0x1]
    %v523 = vlaneseq
    %v524 = vshrl.u32 %v523, 7
    %v525 = vsub.s32 0, %v524
    %v526 = vrot.slane %v522, %v525
    %v543 = vunpack.c.l.b16 %v506
    %v544 = vunpack.c.l.b16 %v507
    %v545 = vunpack.c.l.b16 %v508
    %v546 = vunpack.c.l.b16 %v509
    %v547 = vunpack.c.l.b16 %v510
    %v548 = vunpack.c.l.b16 %v511
    %v549 = vunpack.c.l.b16 %v512
    %v550 = vunpack.c.l.b16 %v513
    %v551 = vunpack.c.l.b16 %v514
    %v552 = vunpack.c.l.b16 %v515
    %v553 = vunpack.c.l.b16 %v516
    %v554 = vunpack.c.l.b16 %v517
    %v555 = vunpack.c.l.b16 %v518
    %v556 = vunpack.c.l.b16 %v519
    %v557 = vunpack.c.l.b16 %v520
    %v558 = vunpack.c.l.b16 %v521
    %v559 = vpack.c.b16 %v544, %v543
    %v560 = vpack.c.b16 %v546, %v545
    %v561 = vpack.c.b16 %v548, %v547
    %v562 = vpack.c.b16 %v550, %v549
    %v563 = vpack.c.b16 %v552, %v551
    %v564 = vpack.c.b16 %v554, %v553
    %v565 = vpack.c.b16 %v556, %v555
    %v566 = vpack.c.b16 %v558, %v557
    %575 = vmatprep.subr.bf16.mxu0 0
    %576 = vmatpush1.bf16.msra.mxu0 %v566
    %577 = vmatprep.subr.bf16.mxu0 0
    %578 = vmatpush1.bf16.msra.mxu0 %v565
    %579 = vmatprep.subr.bf16.mxu0 0
    %580 = vmatpush1.bf16.msra.mxu0 %v564
    %581 = vmatprep.subr.bf16.mxu0 0
    %582 = vmatpush1.bf16.msra.mxu0 %v563
    %583 = vmatprep.subr.bf16.mxu0 0
    %584 = vmatpush1.bf16.msra.mxu0 %v562
    %585 = vmatprep.subr.bf16.mxu0 0
    %586 = vmatpush1.bf16.msra.mxu0 %v561
    %587 = vmatprep.subr.bf16.mxu0 0
    %588 = vmatpush1.bf16.msra.mxu0 %v560
    %589 = vmatprep.subr.bf16.mxu0 0
    %590 = vmatpush1.bf16.msra.mxu0 %v559
    %591 = vmatprep.subr.bf16.mxu0 0
    %592 = vmatpush2.bf16.msra.mxu0 0
    %593 = vmatprep.subr.bf16.mxu0 0
    %594 = vmatpush2.bf16.msra.mxu0 0
    %595 = vmatprep.subr.bf16.mxu0 0
    %596 = vmatpush2.bf16.msra.mxu0 0
    %597 = vmatprep.subr.bf16.mxu0 0
    %598 = vmatpush2.bf16.msra.mxu0 0
    %599 = vmatprep.subr.bf16.mxu0 0
    %600 = vmatpush2.bf16.msra.mxu0 0
    %601 = vmatprep.subr.bf16.mxu0 0
    %602 = vmatpush2.bf16.msra.mxu0 0
    %603 = vmatprep.subr.bf16.mxu0 0
    %604 = vmatpush2.bf16.msra.mxu0 0
    %605 = vmatprep.subr.bf16.mxu0 0
    %606 = vmatpush2.bf16.msra.mxu0 0
    %607 = vmatprep.mubr.bf16.mxu0 0
    %608 = vmatmul.mubr.bf16.gmra.mxu0 %v504
    %v609 = vpop.f32.mrf.mxu0
    %v610 = vadd.f32 %v526, %v609
    %v611 = vpop.f32.mrf.mxu0
    %v612 = vpop.f32.mrf.mxu0
    %v613 = vpop.f32.mrf.mxu0
    %614 = vdwg.mxu0
    %v615 = vld [vmem:[%s3] sm:$0x3]
    %v616 = vmul.f32 %v610, 0.5
    %v617 = vmul.f32 %v616, 1.442695
    %v618 = vpow.pop %v617
    %620 = vrot.lane.b32.xlu0 %v618, 120
    %v621 = vpop.permute.xlu0 %620
    %v623 = vmul.f32 %v615, %v621
    %v624 = vadd.f32 %v610, %v623
    %625 = vst [vmem:[#allocation8] sm:$0x3] 0.0
    %vm626 = vcmask 58368
    %627 = vst.msk [vmem:[#allocation8] sm:$0x3] %vm626, %v624
    %629 = vrot.lane.b32.xlu0 %v610, 8
    %v630 = vpop.permute.xlu0 %629
    %vm632 = vcmask 123968
    %633 = vst.msk [vmem:[#allocation8] sm:$0x3] %vm632, %v630
    %vm634 = vcmask 189568
    %635 = vst.msk [vmem:[#allocation8] sm:$0x3] %vm634, %v630
    // Predicated region
    $region30: #{tpu_custom_call.1} parent=1 // pred_check
      _
    $region31: #{tpu_custom_call.1} parent=1 // pred_check_branch
      %637 = sbr.rel (0) target = $region33
    $region32: #{tpu_custom_call.1} parent=1 // pred_region
      %s639 = ssub.s32 32, 32
      %640 = vsyncadd [#allocation4], %s639
      %s642 = sshll.u32 [#allocation8], 4
      %s643 = int_to_ptr.vmem [resolvable:$true] %s642
      %645 = dma.vmem_to_hbm [thread:$0]  %s643, 32, %s4, [#allocation4]
    $region33: #{tpu_custom_call.1} parent=1 // pred_fallthru
      _
    // Predicated region
    $region34: #{tpu_custom_call.1} parent=1 // pred_check
      _
    $region35: #{tpu_custom_call.1} parent=1 // pred_check_branch
      %647 = sbr.rel (0) target = $region37
    $region36: #{tpu_custom_call.1} parent=1 // pred_region
      %648 = dma.done [#allocation4], 32
    $region37: #{tpu_custom_call.1} parent=1 // pred_fallthru
      _
    %649 = vsyncpa [#allocation3], 1
    %650 = vsyncpa [#allocation6], 1
    %651 = vsyncpa [#allocation4], 1

</llo_original>
